<compile_context>
chip_gen: v7x
topology: tpu7x:2x2x1
jax: 0.10.0
libtpu: 0.0.40
codegen_flags: <defaults>
</compile_context>

<pallas_src>
import jax
import jax.numpy as jnp
from jax.experimental import pallas as pl
from jax.experimental.pallas import tpu as pltpu

IMAGENET_MEAN = (0.485, 0.456, 0.406)
IMAGENET_STD = (0.229, 0.224, 0.225)


def _largest_divisor_leq(n, cap):
    cap = int(max(1, min(n, cap)))
    for d in range(cap, 0, -1):
        if n % d == 0:
            return d
    return 1


# ------------------------------- flow kernel -------------------------------
def _flow_kernel(v_ref, o_ref):
    f32 = jnp.float32
    x = v_ref[...].astype(f32)               # (TB, C, 2, H, W); cast in-kernel (VMEM only)
    f0 = x[:, :, 0]                           # (TB, C, H, W)
    f1 = x[:, :, 1]
    i0 = jnp.mean(f0, axis=1)                 # (TB, H, W)
    dt = jnp.mean(f1 - f0, axis=1)            # (TB, H, W)
    tb, hh, ww = i0.shape

    # Circular central-difference operators built ONCE per grid step (amortized over the
    # TB images in this block) from 2-D iota -- no HBM operands for dx/dy.
    # TODO(synk): at vreg-aligned H,W (multiples of 8/128) prefer pltpu.roll on the XLU
    # instead of these shift-matmuls; sub-vreg widths keep the matmul form for robustness.
    rw = jax.lax.broadcasted_iota(jnp.int32, (ww, ww), 0)     # k (row)
    cw = jax.lax.broadcasted_iota(jnp.int32, (ww, ww), 1)     # w (col)
    w_minus = jnp.logical_or(cw == rw - 1, jnp.logical_and(rw == 0, cw == ww - 1))
    w_plus = jnp.logical_or(cw == rw + 1, jnp.logical_and(rw == ww - 1, cw == 0))
    dx_mat = 0.5 * (w_minus.astype(f32) - w_plus.astype(f32))

    rh = jax.lax.broadcasted_iota(jnp.int32, (hh, hh), 0)     # h (row)
    ch = jax.lax.broadcasted_iota(jnp.int32, (hh, hh), 1)     # k (col)
    h_plus = jnp.logical_or(ch == rh + 1, jnp.logical_and(rh == hh - 1, ch == 0))
    h_minus = jnp.logical_or(ch == rh - 1, jnp.logical_and(rh == 0, ch == hh - 1))
    dy_mat = 0.5 * (h_plus.astype(f32) - h_minus.astype(f32))

    # d/dx: one flattened (TB*H, W) x (W, W) matmul for the whole block.
    didx = jnp.dot(i0.reshape(tb * hh, ww), dx_mat,
                   preferred_element_type=f32).reshape(tb, hh, ww)
    o_ref[:, 0, :, :] = -didx * dt

    # d/dy needs a left-matmul per image; TB is small and static, so a static loop of
    # tiny 2-D matmuls keeps the lowering simple (the iota build above is still shared).
    for b in range(tb):
        didy_b = jnp.dot(dy_mat, i0[b], preferred_element_type=f32)
        o_ref[b, 1, :, :] = -didy_b * dt[b]


def compute_flow(videos):
    # TODO(synk): FlowFwd.compute_flow is abstract in the reference module; this is a
    # deterministic brightness-constancy placeholder: flow = -grad(I0) * dI/dt.
    B, C, T, H, W = videos.shape
    # Slice BEFORE any cast so XLA never materializes an f32 copy of all T frames.
    v01 = videos[:, :, 0:2]
    # Keep the grid length >= 2 where B allows (v7x dual-TC), while still amortizing the
    # per-step operator build over TB images.
    tb = _largest_divisor_leq(B, B // 2) if B >= 2 else 1

    flops = B * (2 * H * W * W + 2 * H * H * W + 8 * C * H * W)
    bytes_accessed = (B * C * 2 * H * W * v01.dtype.itemsize + B * 2 * H * W * 4)

    flow = pl.pallas_call(
        _flow_kernel,
        out_shape=jax.ShapeDtypeStruct((B, 2, H, W), jnp.float32),
        grid=(B // tb,),
        in_specs=[
            pl.BlockSpec((tb, C, 2, H, W), lambda b: (b, 0, 0, 0, 0)),
        ],
        out_specs=pl.BlockSpec((tb, 2, H, W), lambda b: (b, 0, 0, 0)),
        compiler_params=pltpu.CompilerParams(
            dimension_semantics=("parallel",)),
        cost_estimate=pl.CostEstimate(flops=int(flops), transcendentals=0,
                                      bytes_accessed=int(bytes_accessed)),
    )(v01)
    return flow.reshape(B, 2, 1, H, W)


# ----------------------------- two-stream VMAE -----------------------------
def _gelu(x):
    return 0.5 * x * (1.0 + jnp.tanh(0.7978845608028654 * (x + 0.044715 * x * x * x)))


def _vmae_kernel(tp_ref, tf_ref, keep_ref, kbias_ref,
                 wep_ref, bep_ref, wesr_ref, wesf_ref, bes_ref,
                 wqkv_ref, wo_ref, w1_ref, b1_ref, w2_ref, b2_ref,
                 wdp_ref, bdp_ref, wds_ref, bds_ref,
                 outp_ref, outs_ref, h_ref):
    f32 = jnp.float32
    bf16 = jnp.bfloat16
    tb, n, pp = tp_ref.shape
    pf = tf_ref.shape[2]
    d = wo_ref.shape[0]

    # Load small operands once (hoisted broadcasts; JAX does not CSE broadcast_in_dim).
    keep = keep_ref[...]          # (TB, 2N, 1): 1 = visible, 0 = masked
    kbias = kbias_ref[...]        # (TB, 1, 2N): -1e9 on masked keys
    be_p = bep_ref[...]
    be_s = bes_ref[...]
    b1 = b1_ref[...]
    b2 = b2_ref[...]

    # Patch embedding on the flattened (TB*N, feat) matrices so the MXU sees TB*N rows.
    # The secondary stream is [RGB0 | flow] along the feature dim; We_s is pre-split so
    # the RGB0 tokens are shared with the primary stream (x_secondary never materialized).
    # ImageNet normalization is pre-folded into wep/wesr and the biases.
    tp2 = tp_ref[...].reshape(tb * n, pp)
    tf2 = tf_ref[...].reshape(tb * n, pf)
    hp = jnp.dot(tp2, wep_ref[...], preferred_element_type=f32) + be_p
    hs = (jnp.dot(tp2, wesr_ref[...], preferred_element_type=f32)
          + jnp.dot(tf2, wesf_ref[...], preferred_element_type=f32) + be_s)

    # Joint per-sample sequence (primary rows then secondary rows per sample), built once
    # in the persistent VMEM scratch (no in-kernel concatenate).
    h_ref[:, 0:n, :] = hp.reshape(tb, n, d)
    h_ref[:, n:2 * n, :] = hs.reshape(tb, n, d)
    h3 = h_ref[...] * keep                 # masked tokens contribute zero embeddings
    h = h3.reshape(tb * 2 * n, d)          # flat (TB*2N, D) for every projection matmul

    # Fused QKV projection; matmul operands bf16, f32 accumulation.
    hb = h.astype(bf16)
    qkv = jnp.dot(hb, wqkv_ref[...], preferred_element_type=f32)   # (TB*2N, 3D)
    q = qkv[:, 0:d].reshape(tb, 2 * n, d)
    k = qkv[:, d:2 * d].reshape(tb, 2 * n, d)
    v = qkv[:, 2 * d:3 * d].reshape(tb, 2 * n, d)

    # Per-sample joint single-head self-attention (batched over TB inside the step).
    # TODO(synk): at realistic token counts tile this flash-style (online softmax over KV
    # blocks) instead of materializing the full (2N,2N) score matrix.
    s = jnp.einsum('bqd,bkd->bqk', q.astype(bf16), k.astype(bf16),
                   preferred_element_type=f32) * (1.0 / (d ** 0.5))
    s = s + kbias                          # masked keys excluded from the softmax
    s = s - jnp.max(s, axis=-1, keepdims=True)
    p = jnp.exp(s)                         # softmax math in f32 (v5e VPU/EUP lack bf16)
    attn = p * pl.reciprocal(jnp.sum(p, axis=-1, keepdims=True), approx=True)
    ctx = jnp.einsum('bqk,bkd->bqd', attn.astype(bf16), v.astype(bf16),
                     preferred_element_type=f32)
    z = jnp.dot(ctx.reshape(tb * 2 * n, d).astype(bf16), wo_ref[...],
                preferred_element_type=f32)
    h = h + z

    # MLP block (residual); gelu in f32.
    m = _gelu(jnp.dot(h.astype(bf16), w1_ref[...], preferred_element_type=f32) + b1)
    h = h + jnp.dot(m.astype(bf16), w2_ref[...], preferred_element_type=f32) + b2

    # Per-stream pixel decoders on value slices (no scratch store/reload round-trip).
    # Decoder weights/biases are lane-padded to multiples of 128 so these are unmasked
    # vst's; the wrapper trims the padding.
    h3 = h.reshape(tb, 2 * n, d)
    hp_out = h3[:, 0:n, :].reshape(tb * n, d).astype(bf16)
    hs_out = h3[:, n:2 * n, :].reshape(tb * n, d).astype(bf16)
    outp = jnp.dot(hp_out, wdp_ref[...], preferred_element_type=f32) + bdp_ref[...]
    outs = jnp.dot(hs_out, wds_ref[...], preferred_element_type=f32) + bds_ref[...]
    outp_ref[...] = outp.reshape(tb, n, outp_ref.shape[2]).astype(outp_ref.dtype)
    outs_ref[...] = outs.reshape(tb, n, outs_ref.shape[2]).astype(outs_ref.dtype)


def two_stream_vmae(tokens_p, tokens_f, mask_p, mask_s, params):
    B, N, Pp = tokens_p.shape
    _, _, Pf = tokens_f.shape
    Ps = Pp + Pf
    D = params["We_p"].shape[1]
    Dff = params["W1"].shape[1]
    Pp_pad = params["Wd_p"].shape[1]
    Ps_pad = params["Wd_s"].shape[1]

    # TODO(synk): a real MAE drops masked tokens; here masked tokens are zeroed and
    # excluded from attention via a -1e9 key bias so all shapes stay static. A
    # scalar-prefetch gather of the ~1% visible secondary tokens would shrink 2N -> ~N.
    mask_cat = jnp.concatenate([mask_p, mask_s], axis=1).astype(jnp.float32)   # (B, 2N)
    keep = (1.0 - mask_cat).reshape(B, 2 * N, 1)
    kbias = (mask_cat * -1e9).reshape(B, 1, 2 * N)

    # Batch-block so every projection/MLP/decoder matmul has TB*2N (>= ~256 where B
    # allows) rows -- the dominant MXU-utilization lever from the review.
    tb = _largest_divisor_leq(B, -(-256 // (2 * N)))

    def wspec(shape):
        # Revisited weights (constant index map): single-buffered to halve VMEM residency.
        return pl.BlockSpec(shape, lambda b: (0, 0),
                            pipeline_mode=pl.Buffered(buffer_count=1))

    in_specs = [
        pl.BlockSpec((tb, N, Pp), lambda b: (b, 0, 0)),
        pl.BlockSpec((tb, N, Pf), lambda b: (b, 0, 0)),
        pl.BlockSpec((tb, 2 * N, 1), lambda b: (b, 0, 0)),
        pl.BlockSpec((tb, 1, 2 * N), lambda b: (b, 0, 0)),
        wspec((Pp, D)), wspec((1, D)),                      # We_p, be_p
        wspec((Pp, D)), wspec((Pf, D)), wspec((1, D)),      # We_s_rgb, We_s_flow, be_s
        wspec((D, 3 * D)),                                  # fused Wqkv
        wspec((D, D)),                                      # Wo
        wspec((D, Dff)), wspec((1, Dff)),                   # W1, b1
        wspec((Dff, D)), wspec((1, D)),                     # W2, b2
        wspec((D, Pp_pad)), wspec((1, Pp_pad)),             # Wd_p, bd_p (lane-padded)
        wspec((D, Ps_pad)), wspec((1, Ps_pad)),             # Wd_s, bd_s (lane-padded)
    ]

    weight_args = (params["We_p"], params["be_p"], params["We_s_rgb"],
                   params["We_s_flow"], params["be_s"], params["Wqkv"], params["Wo"],
                   params["W1"], params["b1"], params["W2"], params["b2"],
                   params["Wd_p"], params["bd_p"], params["Wd_s"], params["bd_s"])

    flops = B * (
        2 * N * Pp * D + 2 * N * Ps * D                 # patch embeds
        + 2 * (2 * N) * D * (3 * D)                      # fused QKV
        + 4 * (2 * N) * (2 * N) * D                      # scores + context
        + 2 * (2 * N) * D * D                            # output projection
        + 4 * (2 * N) * D * Dff                          # MLP
        + 2 * N * D * (Pp_pad + Ps_pad))                 # decoders
    transcendentals = B * (2 * N) * (Dff + 2 * N + 1)
    bytes_accessed = (sum(int(a.size) * a.dtype.itemsize
                          for a in (tokens_p, tokens_f, keep, kbias) + weight_args)
                      + B * N * (Pp_pad + Ps_pad) * 4)

    out_p, out_s = pl.pallas_call(
        _vmae_kernel,
        out_shape=(jax.ShapeDtypeStruct((B, N, Pp_pad), jnp.float32),
                   jax.ShapeDtypeStruct((B, N, Ps_pad), jnp.float32)),
        grid=(B // tb,),
        in_specs=in_specs,
        out_specs=(pl.BlockSpec((tb, N, Pp_pad), lambda b: (b, 0, 0)),
                   pl.BlockSpec((tb, N, Ps_pad), lambda b: (b, 0, 0))),
        scratch_shapes=[pltpu.VMEM((tb, 2 * N, D), jnp.float32)],
        compiler_params=pltpu.CompilerParams(
            dimension_semantics=("parallel",),
            vmem_limit_bytes=48 * 1024 * 1024),
        cost_estimate=pl.CostEstimate(flops=int(flops),
                                      transcendentals=int(transcendentals),
                                      bytes_accessed=int(bytes_accessed)),
    )(tokens_p, tokens_f, keep, kbias, *weight_args)
    # Trim the lane padding (wrapper-side slice of the lane-dense slabs).
    return out_p[:, :, :Pp], out_s[:, :, :Ps]


# --------------------------------- glue ------------------------------------
def patchify(x, patch):
    # x: (B, C, 1, H, W) -> (B, (H/p)*(W/p), C*p*p); token order row-major over (Hp, Wp),
    # features channel-major.
    B, C, T, H, W = x.shape
    hp, wp = H // patch, W // patch
    x = x.reshape(B, C, T, hp, patch, wp, patch)
    x = x.transpose(0, 3, 5, 1, 2, 4, 6)
    return x.reshape(B, hp * wp, C * T * patch * patch)


def frame_masker(key, batch, n_tokens, mask_fraction):
    # HeterogeneousFrameMasker with a single FrameGroup(num_frames=1): True = masked.
    n_mask = int(mask_fraction * n_tokens)
    if n_mask == 0:
        return jnp.zeros((batch, n_tokens), jnp.bool_)
    keys = jax.random.split(key, batch)

    def one(k):
        perm = jax.random.permutation(k, n_tokens)
        return jnp.zeros((n_tokens,), jnp.bool_).at[perm[:n_mask]].set(True)

    return jax.vmap(one)(keys)


def init_params(key, c_primary, c_secondary, patch, d, dff):
    pp = c_primary * patch * patch
    ps = c_secondary * patch * patch
    ks = jax.random.split(key, 10)

    def w(k, shape, scale=0.02):
        return jax.random.normal(k, shape, jnp.float32) * scale

    return dict(
        We_p=w(ks[0], (pp, d)), be_p=jnp.zeros((1, d), jnp.float32),
        We_s=w(ks[1], (ps, d)), be_s=jnp.zeros((1, d), jnp.float32),
        Wq=w(ks[2], (d, d)), Wk=w(ks[3], (d, d)),
        Wv=w(ks[4], (d, d)), Wo=w(ks[5], (d, d)),
        W1=w(ks[6], (d, dff)), b1=jnp.zeros((1, dff), jnp.float32),
        W2=w(ks[7], (dff, d)), b2=jnp.zeros((1, d), jnp.float32),
        Wd_p=w(ks[8], (d, pp)), bd_p=jnp.zeros((1, pp), jnp.float32),
        Wd_s=w(ks[9], (d, ps)), bd_s=jnp.zeros((1, ps), jnp.float32),
    )


def prepare_kernel_params(params, patch, c_rgb=3):
    """Fold ImageNet normalization into the patch-embed weights (affine), split We_s into
    its RGB / flow row-blocks (so x_secondary never has to be materialized), fuse Wq/Wk/Wv,
    lane-pad the decoder weights to multiples of 128, and cast matmul weights to bf16."""
    f32, bf16 = jnp.float32, jnp.bfloat16
    mean = jnp.asarray(IMAGENET_MEAN, f32)
    istd = 1.0 / jnp.asarray(IMAGENET_STD, f32)
    ppc = patch * patch
    pp = c_rgb * ppc
    scale_rgb = jnp.repeat(istd, ppc)          # per-feature 1/std (channel-major tokens)
    shift_rgb = jnp.repeat(mean * istd, ppc)   # per-feature mean/std

    we_p = params["We_p"]
    we_p_f = we_p * scale_rgb[:, None]
    be_p_f = params["be_p"] - shift_rgb[None, :] @ we_p

    we_s = params["We_s"]                      # rows ordered [RGB features | flow features]
    we_s_rgb, we_s_flow = we_s[:pp], we_s[pp:]
    we_s_rgb_f = we_s_rgb * scale_rgb[:, None]
    be_s_f = params["be_s"] - shift_rgb[None, :] @ we_s_rgb

    wqkv = jnp.concatenate([params["Wq"], params["Wk"], params["Wv"]], axis=1)

    def pad_lanes(a):
        pad = (-a.shape[-1]) % 128
        if pad == 0:
            return a
        return jnp.pad(a, [(0, 0)] * (a.ndim - 1) + [(0, pad)])

    return dict(
        We_p=we_p_f.astype(bf16), be_p=be_p_f.astype(f32),
        We_s_rgb=we_s_rgb_f.astype(bf16), We_s_flow=we_s_flow.astype(bf16),
        be_s=be_s_f.astype(f32),
        Wqkv=wqkv.astype(bf16), Wo=params["Wo"].astype(bf16),
        W1=params["W1"].astype(bf16), b1=params["b1"].astype(f32),
        W2=params["W2"].astype(bf16), b2=params["b2"].astype(f32),
        Wd_p=pad_lanes(params["Wd_p"]).astype(bf16), bd_p=pad_lanes(params["bd_p"]).astype(f32),
        Wd_s=pad_lanes(params["Wd_s"]).astype(bf16), bd_s=pad_lanes(params["bd_s"]).astype(f32),
    )


def flow_fwd_forward(videos, params, patch, flow_mask_fraction, mask_key):
    B, C, T, H, W = videos.shape
    n_tokens = (H // patch) * (W // patch)

    # Primary stream: frame-0 tokens. ImageNet normalization is folded into We_p/be_p
    # (and the RGB row-block of We_s), so no normalize pass over the video is needed.
    frame0 = videos[:, :, 0:1]                                     # (B, 3, 1, H, W)
    mask_primary = frame_masker(jax.random.fold_in(mask_key, 0), B, n_tokens, 0.0)

    # Secondary stream: [RGB0, flow]; flow is computed from the *raw* video (reference
    # behaviour). The two parts are fed as separate token refs to the VMAE kernel, so the
    # concatenated x_secondary is never written to HBM.
    flow = compute_flow(videos)                                    # (B, 2, 1, H, W)
    mask_secondary = frame_masker(jax.random.fold_in(mask_key, 1), B, n_tokens,
                                  flow_mask_fraction)

    tokens_p = patchify(frame0, patch).astype(jnp.bfloat16)        # (B, N, 3*p*p)
    tokens_f = patchify(flow, patch).astype(jnp.bfloat16)          # (B, N, 2*p*p)
    out_primary, _out_secondary = two_stream_vmae(tokens_p, tokens_f,
                                                  mask_primary, mask_secondary, params)
    return out_primary, mask_primary, mask_secondary, flow


if __name__ == "__main__":
    key = jax.random.PRNGKey(0)
    k_vid, k_param, k_mask = jax.random.split(key, 3)

    # N = (H/p)*(W/p) = 16 tokens/stream (sublane-tile aligned); TB*2N = 128 joint rows
    # per grid step; flow grid has 2 parallel steps. D/Dff lane-aligned.
    B, C, T, H, W = 4, 3, 2, 32, 32
    patch, D, Dff = 8, 128, 256

    videos = jax.random.uniform(k_vid, (B, C, T, H, W), jnp.float32)   # RGB in [0, 1]
    base_params = init_params(k_param, c_primary=3, c_secondary=3 + 2,
                              patch=patch, d=D, dff=Dff)
    params = prepare_kernel_params(base_params, patch=patch)

    out_primary, mask_primary, mask_secondary, flow = flow_fwd_forward(
        videos, params, patch=patch, flow_mask_fraction=0.99, mask_key=k_mask)

    jax.block_until_ready((out_primary, mask_primary, mask_secondary, flow))
    n_tok = (H // patch) * (W // patch)
    assert out_primary.shape == (B, n_tok, 3 * patch * patch)
    assert out_primary.dtype == jnp.float32
    assert mask_primary.shape == (B, n_tok)
    assert mask_secondary.shape == (B, n_tok)
    assert flow.shape == (B, 2, 1, H, W)
    assert bool(jnp.all(jnp.isfinite(out_primary)))
    assert bool(jnp.all(jnp.isfinite(flow)))
    print("KERNEL_OK")
</pallas_src>

<mosaic_0001>
module attributes {stable_mosaic.version = 11 : i64} {
  func.func @_flow_kernel(%arg0: i32, %arg1: memref<2x3x2x32x32xf32, #tpu.memory_space<vmem>>, %arg2: memref<2x2x32x32xf32, #tpu.memory_space<vmem>>) attributes {dimension_semantics = [#tpu.dimension_semantics<parallel>], iteration_bounds = array<i64: 2>, scalar_prefetch = 0 : i64, scratch_operands = 0 : i64, tpu.core_type = #tpu.core_type<tc>, window_params = [{transform_indices = @transform_0, window_bounds = array<i64: 2, 3, 2, 32, 32>}, {transform_indices = @transform_1, window_bounds = array<i64: 2, 2, 32, 32>}]} {
    %c0 = arith.constant 0 : index
    %c0_0 = arith.constant 0 : index
    %c0_1 = arith.constant 0 : index
    %c0_2 = arith.constant 0 : index
    %c0_3 = arith.constant 0 : index
    %0 = vector.load %arg1[%c0, %c0_0, %c0_1, %c0_2, %c0_3] : memref<2x3x2x32x32xf32, #tpu.memory_space<vmem>>, vector<2x3x2x32x32xf32>
    %1 = vector.extract_strided_slice %0 {offsets = [0, 0, 0, 0, 0], sizes = [2, 3, 1, 32, 32], strides = [1, 1, 1, 1, 1]} : vector<2x3x2x32x32xf32> to vector<2x3x1x32x32xf32>
    %2 = vector.shape_cast %1 : vector<2x3x1x32x32xf32> to vector<2x3x32x32xf32>
    %3 = vector.extract_strided_slice %0 {offsets = [0, 0, 1, 0, 0], sizes = [2, 3, 1, 32, 32], strides = [1, 1, 1, 1, 1]} : vector<2x3x2x32x32xf32> to vector<2x3x1x32x32xf32>
    %4 = vector.shape_cast %3 : vector<2x3x1x32x32xf32> to vector<2x3x32x32xf32>
    %cst = arith.constant dense<0.000000e+00> : vector<2x32x32xf32>
    %5 = vector.multi_reduction <add>, %2, %cst [1] : vector<2x3x32x32xf32> to vector<2x32x32xf32>
    %cst_4 = arith.constant 3.000000e+00 : f32
    %6 = vector.broadcast %cst_4 : f32 to vector<2x32x32xf32>
    %7 = arith.divf %5, %6 : vector<2x32x32xf32>
    %8 = arith.subf %4, %2 : vector<2x3x32x32xf32>
    %cst_5 = arith.constant dense<0.000000e+00> : vector<2x32x32xf32>
    %9 = vector.multi_reduction <add>, %8, %cst_5 [1] : vector<2x3x32x32xf32> to vector<2x32x32xf32>
    %cst_6 = arith.constant 3.000000e+00 : f32
    %10 = vector.broadcast %cst_6 : f32 to vector<2x32x32xf32>
    %11 = arith.divf %9, %10 : vector<2x32x32xf32>
    %12 = tpu.iota {dimensions = array<i32: 0>} : vector<32x32xi32>
    %13 = tpu.iota {dimensions = array<i32: 1>} : vector<32x32xi32>
    %c1_i32 = arith.constant 1 : i32
    %14 = vector.broadcast %c1_i32 : i32 to vector<32x32xi32>
    %15 = arith.subi %12, %14 : vector<32x32xi32>
    %16 = arith.cmpi eq, %13, %15 : vector<32x32xi32>
    %c0_i32 = arith.constant 0 : i32
    %17 = vector.broadcast %c0_i32 : i32 to vector<32x32xi32>
    %18 = arith.cmpi eq, %12, %17 : vector<32x32xi32>
    %c31_i32 = arith.constant 31 : i32
    %19 = vector.broadcast %c31_i32 : i32 to vector<32x32xi32>
    %20 = arith.cmpi eq, %13, %19 : vector<32x32xi32>
    %21 = arith.andi %18, %20 : vector<32x32xi1>
    %22 = arith.ori %16, %21 : vector<32x32xi1>
    %c1_i32_7 = arith.constant 1 : i32
    %23 = vector.broadcast %c1_i32_7 : i32 to vector<32x32xi32>
    %24 = arith.addi %12, %23 : vector<32x32xi32>
    %25 = arith.cmpi eq, %13, %24 : vector<32x32xi32>
    %c31_i32_8 = arith.constant 31 : i32
    %26 = vector.broadcast %c31_i32_8 : i32 to vector<32x32xi32>
    %27 = arith.cmpi eq, %12, %26 : vector<32x32xi32>
    %c0_i32_9 = arith.constant 0 : i32
    %28 = vector.broadcast %c0_i32_9 : i32 to vector<32x32xi32>
    %29 = arith.cmpi eq, %13, %28 : vector<32x32xi32>
    %30 = arith.andi %27, %29 : vector<32x32xi1>
    %31 = arith.ori %25, %30 : vector<32x32xi1>
    %32 = arith.extui %22 : vector<32x32xi1> to vector<32x32xi32>
    %33 = arith.sitofp %32 : vector<32x32xi32> to vector<32x32xf32>
    %34 = arith.extui %31 : vector<32x32xi1> to vector<32x32xi32>
    %35 = arith.sitofp %34 : vector<32x32xi32> to vector<32x32xf32>
    %36 = arith.subf %33, %35 : vector<32x32xf32>
    %cst_10 = arith.constant 5.000000e-01 : f32
    %37 = vector.broadcast %cst_10 : f32 to vector<32x32xf32>
    %38 = arith.mulf %37, %36 : vector<32x32xf32>
    %39 = tpu.iota {dimensions = array<i32: 0>} : vector<32x32xi32>
    %40 = tpu.iota {dimensions = array<i32: 1>} : vector<32x32xi32>
    %c1_i32_11 = arith.constant 1 : i32
    %41 = vector.broadcast %c1_i32_11 : i32 to vector<32x32xi32>
    %42 = arith.addi %39, %41 : vector<32x32xi32>
    %43 = arith.cmpi eq, %40, %42 : vector<32x32xi32>
    %c31_i32_12 = arith.constant 31 : i32
    %44 = vector.broadcast %c31_i32_12 : i32 to vector<32x32xi32>
    %45 = arith.cmpi eq, %39, %44 : vector<32x32xi32>
    %c0_i32_13 = arith.constant 0 : i32
    %46 = vector.broadcast %c0_i32_13 : i32 to vector<32x32xi32>
    %47 = arith.cmpi eq, %40, %46 : vector<32x32xi32>
    %48 = arith.andi %45, %47 : vector<32x32xi1>
    %49 = arith.ori %43, %48 : vector<32x32xi1>
    %c1_i32_14 = arith.constant 1 : i32
    %50 = vector.broadcast %c1_i32_14 : i32 to vector<32x32xi32>
    %51 = arith.subi %39, %50 : vector<32x32xi32>
    %52 = arith.cmpi eq, %40, %51 : vector<32x32xi32>
    %c0_i32_15 = arith.constant 0 : i32
    %53 = vector.broadcast %c0_i32_15 : i32 to vector<32x32xi32>
    %54 = arith.cmpi eq, %39, %53 : vector<32x32xi32>
    %c31_i32_16 = arith.constant 31 : i32
    %55 = vector.broadcast %c31_i32_16 : i32 to vector<32x32xi32>
    %56 = arith.cmpi eq, %40, %55 : vector<32x32xi32>
    %57 = arith.andi %54, %56 : vector<32x32xi1>
    %58 = arith.ori %52, %57 : vector<32x32xi1>
    %59 = arith.extui %49 : vector<32x32xi1> to vector<32x32xi32>
    %60 = arith.sitofp %59 : vector<32x32xi32> to vector<32x32xf32>
    %61 = arith.extui %58 : vector<32x32xi1> to vector<32x32xi32>
    %62 = arith.sitofp %61 : vector<32x32xi32> to vector<32x32xf32>
    %63 = arith.subf %60, %62 : vector<32x32xf32>
    %cst_17 = arith.constant 5.000000e-01 : f32
    %64 = vector.broadcast %cst_17 : f32 to vector<32x32xf32>
    %65 = arith.mulf %64, %63 : vector<32x32xf32>
    %66 = vector.shape_cast %7 : vector<2x32x32xf32> to vector<64x32xf32>
    %cst_18 = arith.constant dense<0.000000e+00> : vector<64x32xf32>
    %67 = tpu.matmul %66, %38, %cst_18 {dimension_numbers = #tpu.dot_dimension_numbers<[1], [0], [0], [1], [0, 0, 1, 1], [], []>} : vector<64x32xf32>, vector<32x32xf32>, vector<64x32xf32> -> vector<64x32xf32>
    %68 = vector.shape_cast %67 : vector<64x32xf32> to vector<2x32x32xf32>
    %cst_19 = arith.constant 0.000000e+00 : f32
    %69 = vector.broadcast %cst_19 : f32 to vector<2x32x32xf32>
    %70 = arith.subf %69, %68 : vector<2x32x32xf32>
    %71 = arith.mulf %70, %11 : vector<2x32x32xf32>
    %c0_20 = arith.constant 0 : index
    %c0_21 = arith.constant 0 : index
    %c0_22 = arith.constant 0 : index
    %c0_23 = arith.constant 0 : index
    %72 = vector.load %arg2[%c0_20, %c0_21, %c0_22, %c0_23] : memref<2x2x32x32xf32, #tpu.memory_space<vmem>>, vector<2x1x32x32xf32>
    %73 = vector.shape_cast %72 : vector<2x1x32x32xf32> to vector<2x32x32xf32>
    %74 = vector.shape_cast %71 : vector<2x32x32xf32> to vector<2x1x32x32xf32>
    tpu.vector_store %arg2[%c0_20, %c0_21, %c0_22, %c0_23], %74 {strides = array<i32>} : memref<2x2x32x32xf32, #tpu.memory_space<vmem>>, vector<2x1x32x32xf32>,
    %75 = vector.extract_strided_slice %7 {offsets = [0, 0, 0], sizes = [1, 32, 32], strides = [1, 1, 1]} : vector<2x32x32xf32> to vector<1x32x32xf32>
    %76 = vector.shape_cast %75 : vector<1x32x32xf32> to vector<32x32xf32>
    %cst_24 = arith.constant dense<0.000000e+00> : vector<32x32xf32>
    %77 = tpu.matmul %65, %76, %cst_24 {dimension_numbers = #tpu.dot_dimension_numbers<[1], [0], [0], [1], [0, 0, 1, 1], [], []>} : vector<32x32xf32>, vector<32x32xf32>, vector<32x32xf32> -> vector<32x32xf32>
    %cst_25 = arith.constant 0.000000e+00 : f32
    %78 = vector.broadcast %cst_25 : f32 to vector<32x32xf32>
    %79 = arith.subf %78, %77 : vector<32x32xf32>
    %80 = vector.extract_strided_slice %11 {offsets = [0, 0, 0], sizes = [1, 32, 32], strides = [1, 1, 1]} : vector<2x32x32xf32> to vector<1x32x32xf32>
    %81 = vector.shape_cast %80 : vector<1x32x32xf32> to vector<32x32xf32>
    %82 = arith.mulf %79, %81 : vector<32x32xf32>
    %c0_26 = arith.constant 0 : index
    %c1 = arith.constant 1 : index
    %c0_27 = arith.constant 0 : index
    %c0_28 = arith.constant 0 : index
    %83 = vector.load %arg2[%c0_26, %c1, %c0_27, %c0_28] : memref<2x2x32x32xf32, #tpu.memory_space<vmem>>, vector<1x1x32x32xf32>
    %84 = vector.shape_cast %83 : vector<1x1x32x32xf32> to vector<32x32xf32>
    %85 = vector.shape_cast %82 : vector<32x32xf32> to vector<1x1x32x32xf32>
    tpu.vector_store %arg2[%c0_26, %c1, %c0_27, %c0_28], %85 {strides = array<i32>} : memref<2x2x32x32xf32, #tpu.memory_space<vmem>>, vector<1x1x32x32xf32>,
    %86 = vector.extract_strided_slice %7 {offsets = [1, 0, 0], sizes = [1, 32, 32], strides = [1, 1, 1]} : vector<2x32x32xf32> to vector<1x32x32xf32>
    %87 = vector.shape_cast %86 : vector<1x32x32xf32> to vector<32x32xf32>
    %cst_29 = arith.constant dense<0.000000e+00> : vector<32x32xf32>
    %88 = tpu.matmul %65, %87, %cst_29 {dimension_numbers = #tpu.dot_dimension_numbers<[1], [0], [0], [1], [0, 0, 1, 1], [], []>} : vector<32x32xf32>, vector<32x32xf32>, vector<32x32xf32> -> vector<32x32xf32>
    %cst_30 = arith.constant 0.000000e+00 : f32
    %89 = vector.broadcast %cst_30 : f32 to vector<32x32xf32>
    %90 = arith.subf %89, %88 : vector<32x32xf32>
    %91 = vector.extract_strided_slice %11 {offsets = [1, 0, 0], sizes = [1, 32, 32], strides = [1, 1, 1]} : vector<2x32x32xf32> to vector<1x32x32xf32>
    %92 = vector.shape_cast %91 : vector<1x32x32xf32> to vector<32x32xf32>
    %93 = arith.mulf %90, %92 : vector<32x32xf32>
    %c1_31 = arith.constant 1 : index
    %c1_32 = arith.constant 1 : index
    %c0_33 = arith.constant 0 : index
    %c0_34 = arith.constant 0 : index
    %94 = vector.load %arg2[%c1_31, %c1_32, %c0_33, %c0_34] : memref<2x2x32x32xf32, #tpu.memory_space<vmem>>, vector<1x1x32x32xf32>
    %95 = vector.shape_cast %94 : vector<1x1x32x32xf32> to vector<32x32xf32>
    %96 = vector.shape_cast %93 : vector<32x32xf32> to vector<1x1x32x32xf32>
    tpu.vector_store %arg2[%c1_31, %c1_32, %c0_33, %c0_34], %96 {strides = array<i32>} : memref<2x2x32x32xf32, #tpu.memory_space<vmem>>, vector<1x1x32x32xf32>,
    return
  }
  func.func @transform_0(%arg0: i32) -> (i32, i32, i32, i32, i32) {
    %c0_i32 = arith.constant 0 : i32
    %c0_i32_0 = arith.constant 0 : i32
    %c0_i32_1 = arith.constant 0 : i32
    %c0_i32_2 = arith.constant 0 : i32
    %c0_i32_3 = arith.constant 0 : i32
    return %arg0, %c0_i32, %c0_i32_0, %c0_i32_1, %c0_i32_2 : i32, i32, i32, i32, i32
  }
  func.func @transform_1(%arg0: i32) -> (i32, i32, i32, i32) {
    %c0_i32 = arith.constant 0 : i32
    %c0_i32_0 = arith.constant 0 : i32
    %c0_i32_1 = arith.constant 0 : i32
    %c0_i32_2 = arith.constant 0 : i32
    return %arg0, %c0_i32, %c0_i32_0, %c0_i32_1 : i32, i32, i32, i32
  }
}

</mosaic_0001>

<llo_original>
// kernel: tpu_custom_call.1
$region0: #{tpu_custom_call.1}
  #allocation0 [shape = 'u32[]', space=smem, size = 0x4, offset = 0x4, fixed_abs, tag = 'smem constant byte address 0x4 - core index']
  #allocation1 [shape = 'u32[144,128]{1,0:T(1,128)}', space=vmem, size = 0x12000, scoped, tag = 'internal scratch']
  %s0 = inlined_call_operand.hbm [shape: f32[4,3,2,32,32], index: 0, kind: input, shape index: {}]
  %s1 = inlined_call_operand.hbm [shape: f32[4,2,32,32], index: 1, kind: output, shape index: {}]
  %s2 = sld [smem:[#allocation0]]
  $region41: #{tpu_custom_call.1} parent=0
    _
  %s4 = ssub.s32 1, %s2
  %s5 = scalar_select 0, %s4, %s2
  $region1: #{tpu_custom_call.1} parent=0
    #allocation2 [shape = 'u8[393216]{0}', space=vmem, size = 0x60000, scoped, tag = 'input window, operand 0']
    #allocation3 [shape = 's32[2]{0}', space=sflag, size = 0x8, scoped, tag = 'scoped memory for tpu_custom_call.1']
    #allocation4 [shape = 's32[2]{0}', space=sflag, size = 0x8, scoped, tag = 'scoped memory for tpu_custom_call.1']
    #allocation5 [shape = 'u8[131072]{0}', space=vmem, size = 0x20000, scoped, tag = 'output window, operand 0']
    %6 = vsyncpa [#allocation3], 0
    %s7 = scalar_lea.sflag [#allocation3], 1
    %8 = vsyncpa %s7, 0
    %9 = vsyncpa [#allocation4], 0
    %s10 = scalar_lea.sflag [#allocation4], 1
    %11 = vsyncpa %s10, 0
    loop: start=0, step=1, limit=4
    $region2: #{tpu_custom_call.1} parent=1 // loop_pre_header
      _
    $region3: #{tpu_custom_call.1} parent=1 // loop_header
      %s13 = sphi 0, %s17
      %p14 = scmp.ge.s32.totalorder %s13, 4
      %s23 = sphi 0, %s25
      %s26 = sphi 0, %s23
      %s27 = sphi 0, %s26
      %s43 = sphi 0, %s27
      %s49 = sphi 0, %s51
      %s52 = sphi 0, %s49
      %s53 = sphi 0, %s52
      %s69 = sphi 0, %s53
    $region4: #{tpu_custom_call.1} parent=1 // loop_header_branch
      %16 = sbr.rel (%p14) target = $region8
    $region5: #{tpu_custom_call.1} parent=1 // loop_body
      %s18 = ssub.s32 %s13, 1
      %s19 = ssub.s32 %s13, 2
      %s20 = sadd.s32 %s13, 1
      %s21 = ssub.s32 %s13, %s20
      %p22 = scmp.eq.s32.totalorder %s21, 0
      %s24 = sadd.s32 %s23, 1
      %s25 = scalar_select %p22, %s23, %s24
      %p28 = pneg %p22
      %p29 = scmp.eq.s32.totalorder %s13, 1
      %p30 = por %p28, %p29
      %p31 = scmp.ne.s32.totalorder %s23, %s26
      %p32 = scmp.eq.s32.totalorder %s13, 0
      %p33 = por %p31, %p32
      %p34 = scmp.ne.s32.totalorder %s23, %s26
      %p35 = scmp.eq.s32.totalorder %s18, 1
      %p36 = por %p34, %p35
      %p37 = scmp.ne.s32.totalorder %s26, %s27
      %p38 = scmp.eq.s32.totalorder %s18, 0
      %p39 = por %p37, %p38
      %p40 = scmp.ne.s32.totalorder %s26, %s27
      %p41 = scmp.eq.s32.totalorder %s19, 1
      %p42 = por %p40, %p41
      %p44 = scmp.ne.s32.totalorder %s27, %s43
      %p45 = scmp.eq.s32.totalorder %s19, 0
      %p46 = por %p44, %p45
      %s47 = ssub.s32 %s13, %s20
      %p48 = scmp.eq.s32.totalorder %s47, 0
      %s50 = sadd.s32 %s49, 1
      %s51 = scalar_select %p48, %s49, %s50
      %p54 = pneg %p48
      %p55 = scmp.eq.s32.totalorder %s13, 1
      %p56 = por %p54, %p55
      %p57 = scmp.ne.s32.totalorder %s49, %s52
      %p58 = scmp.eq.s32.totalorder %s13, 0
      %p59 = por %p57, %p58
      %p60 = scmp.ne.s32.totalorder %s49, %s52
      %p61 = scmp.eq.s32.totalorder %s18, 1
      %p62 = por %p60, %p61
      %p63 = scmp.ne.s32.totalorder %s52, %s53
      %p64 = scmp.eq.s32.totalorder %s18, 0
      %p65 = por %p63, %p64
      %p66 = scmp.ne.s32.totalorder %s52, %s53
      %p67 = scmp.eq.s32.totalorder %s19, 1
      %p68 = por %p66, %p67
      %p70 = scmp.ne.s32.totalorder %s53, %s69
      %p71 = scmp.eq.s32.totalorder %s19, 0
      %p72 = por %p70, %p71
      %p73 = scmp.le.s32.totalorder 1, %s13
      %p74 = scmp.lt.s32.totalorder %s13, 3
      %p75 = pnand %p73, %p74
      %p76 = pneg %p75
      // Predicated region
      $region9: #{tpu_custom_call.1} parent=5 // pred_check
        _
      $region10: #{tpu_custom_call.1} parent=5 // pred_check_branch
        %78 = sbr.rel (%p75) target = $region12
      $region11: #{tpu_custom_call.1} parent=5 // pred_region
        %s79 = ssub.s32 %s13, 1
      $region12: #{tpu_custom_call.1} parent=5 // pred_fallthru
        _
      %p80 = scmp.lt.s32.totalorder %s13, 2
      // Predicated region
      $region13: #{tpu_custom_call.1} parent=5 // pred_check
        %p81 = pneg %p80
      $region14: #{tpu_custom_call.1} parent=5 // pred_check_branch
        %83 = sbr.rel (%p81) target = $region16
      $region15: #{tpu_custom_call.1} parent=5 // pred_region
        // Predicated region
        $region17: #{tpu_custom_call.1} parent=15 // pred_check
          %p84 = pneg %p33
        $region18: #{tpu_custom_call.1} parent=15 // pred_check_branch
          %86 = sbr.rel (%p84) target = $region20
        $region19: #{tpu_custom_call.1} parent=15 // pred_region
          %s87 = sand.u32 %s23, 1
          %s88 = scalar_lea.sflag [#allocation3], %s87
          %s89 = sand.u32 %s23, 1
          %s90 = smul.addr %s89, 384
          %s91 = scalar_lea.vmem [#allocation2], %s90
          %s92 = smul.u32 2, %s13
          %s94 = ssub.s32 6144, 6144
          %95 = vsyncadd %s88, %s94
          %s96 = smul.addr %s92, 24
          %s97 = smul.addr %s96, 128
          %s98 = scalar_lea.hbm %s0, %s97
          %s99 = sshll.u32 %s91, 4
          %s100 = int_to_ptr.vmem [resolvable:$true] %s99
          %105 = dma.hbm_to_vmem [thread:$0]  %s98, 6144, %s100, %s88, 128, 128, 8
        $region20: #{tpu_custom_call.1} parent=15 // pred_fallthru
          _
      $region16: #{tpu_custom_call.1} parent=5 // pred_fallthru
        _
      %p106 = scmp.le.s32.totalorder 1, %s13
      %p107 = scmp.lt.s32.totalorder %s13, 3
      %p108 = pnand %p106, %p107
      %p109 = pneg %p108
      // Predicated region
      $region21: #{tpu_custom_call.1} parent=5 // pred_check
        _
      $region22: #{tpu_custom_call.1} parent=5 // pred_check_branch
        %111 = sbr.rel (%p108) target = $region24
      $region23: #{tpu_custom_call.1} parent=5 // pred_region
        %s112 = ssub.s32 %s13, 1
        %s113 = sand.u32 %s26, 1
        %s114 = scalar_lea.sflag [#allocation3], %s113
        %s115 = sand.u32 %s26, 1
        %s116 = smul.addr %s115, 384
        %s117 = scalar_lea.vmem [#allocation2], %s116
        // Predicated region
        $region25: #{tpu_custom_call.1} parent=23 // pred_check
          %p118 = pneg %p39
        $region26: #{tpu_custom_call.1} parent=23 // pred_check_branch
          %120 = sbr.rel (%p118) target = $region28
        $region27: #{tpu_custom_call.1} parent=23 // pred_region
          %121 = dma.done %s114, 6144
        $region28: #{tpu_custom_call.1} parent=23 // pred_fallthru
          _
        %s122 = sand.u32 %s26, 1
        %s123 = scalar_lea.sflag [#allocation3], %s122
        %s124 = sand.u32 %s26, 1
        %s125 = smul.addr %s124, 384
        %s126 = scalar_lea.vmem [#allocation2], %s125
        %p127 = pneg %p39
        %p128 = pneg %p36
        %p129 = pneg %p65
        %p130 = pneg %p62
        %s131 = sand.u32 %s52, 1
        %s132 = scalar_lea.sflag [#allocation4], %s131
        %s133 = sand.u32 %s52, 1
        %s134 = smul.addr %s133, 128
        %s135 = scalar_lea.vmem [#allocation5], %s134
        %s136 = smul.u32 2, %s18
        %s137 = smul.u32 2, %s18
        %v138 = vld [vmem:[%s117] sm:$0xff]
        %v139 = vld [vmem:[%s117 + $0x8] sm:$0xff]
        %v140 = vld [vmem:[%s117 + $0x10] sm:$0xff]
        %v141 = vld [vmem:[%s117 + $0x18] sm:$0xff]
        %v142 = vld [vmem:[%s117 + $0x20] sm:$0xff]
        %v143 = vld [vmem:[%s117 + $0x28] sm:$0xff]
        %v144 = vld [vmem:[%s117 + $0x30] sm:$0xff]
        %v145 = vld [vmem:[%s117 + $0x38] sm:$0xff]
        %v146 = vld [vmem:[%s117 + $0x40] sm:$0xff]
        %v147 = vld [vmem:[%s117 + $0x48] sm:$0xff]
        %v148 = vld [vmem:[%s117 + $0x50] sm:$0xff]
        %v149 = vld [vmem:[%s117 + $0x58] sm:$0xff]
        %v150 = vld [vmem:[%s117 + $0x60] sm:$0xff]
        %v151 = vld [vmem:[%s117 + $0x68] sm:$0xff]
        %v152 = vld [vmem:[%s117 + $0x70] sm:$0xff]
        %v153 = vld [vmem:[%s117 + $0x78] sm:$0xff]
        %v154 = vld [vmem:[%s117 + $0x80] sm:$0xff]
        %v155 = vld [vmem:[%s117 + $0x88] sm:$0xff]
        %v156 = vld [vmem:[%s117 + $0x90] sm:$0xff]
        %v157 = vld [vmem:[%s117 + $0x98] sm:$0xff]
        %v158 = vld [vmem:[%s117 + $0xa0] sm:$0xff]
        %v159 = vld [vmem:[%s117 + $0xa8] sm:$0xff]
        %v160 = vld [vmem:[%s117 + $0xb0] sm:$0xff]
        %v161 = vld [vmem:[%s117 + $0xb8] sm:$0xff]
        %v162 = vld [vmem:[%s117 + $0xc0] sm:$0xff]
        %v163 = vld [vmem:[%s117 + $0xc8] sm:$0xff]
        %v164 = vld [vmem:[%s117 + $0xd0] sm:$0xff]
        %v165 = vld [vmem:[%s117 + $0xd8] sm:$0xff]
        %v166 = vld [vmem:[%s117 + $0xe0] sm:$0xff]
        %v167 = vld [vmem:[%s117 + $0xe8] sm:$0xff]
        %v168 = vld [vmem:[%s117 + $0xf0] sm:$0xff]
        %v169 = vld [vmem:[%s117 + $0xf8] sm:$0xff]
        %v170 = vld [vmem:[%s117 + $0x100] sm:$0xff]
        %v171 = vld [vmem:[%s117 + $0x108] sm:$0xff]
        %v172 = vld [vmem:[%s117 + $0x110] sm:$0xff]
        %v173 = vld [vmem:[%s117 + $0x118] sm:$0xff]
        %v174 = vld [vmem:[%s117 + $0x120] sm:$0xff]
        %v175 = vld [vmem:[%s117 + $0x128] sm:$0xff]
        %v176 = vld [vmem:[%s117 + $0x130] sm:$0xff]
        %v177 = vld [vmem:[%s117 + $0x138] sm:$0xff]
        %v178 = vld [vmem:[%s117 + $0x140] sm:$0xff]
        %v179 = vld [vmem:[%s117 + $0x148] sm:$0xff]
        %v180 = vld [vmem:[%s117 + $0x150] sm:$0xff]
        %v181 = vld [vmem:[%s117 + $0x158] sm:$0xff]
        %v182 = vld [vmem:[%s117 + $0x160] sm:$0xff]
        %v183 = vld [vmem:[%s117 + $0x168] sm:$0xff]
        %v184 = vld [vmem:[%s117 + $0x170] sm:$0xff]
        %v185 = vld [vmem:[%s117 + $0x178] sm:$0xff]
        %vm186 = vcmask 261120
        %v187 = vsel %vm186, %v138, 0.0
        %v188 = vsel %vm186, %v146, 0.0
        %v189 = vadd.f32 %v187, %v188
        %v190 = vsel %vm186, %v154, 0.0
        %v191 = vadd.f32 %v189, %v190
        %v192 = vsel %vm186, %v139, 0.0
        %v193 = vsel %vm186, %v147, 0.0
        %v194 = vadd.f32 %v192, %v193
        %v195 = vsel %vm186, %v155, 0.0
        %v196 = vadd.f32 %v194, %v195
        %v197 = vsel %vm186, %v140, 0.0
        %v198 = vsel %vm186, %v148, 0.0
        %v199 = vadd.f32 %v197, %v198
        %v200 = vsel %vm186, %v156, 0.0
        %v201 = vadd.f32 %v199, %v200
        %v202 = vsel %vm186, %v141, 0.0
        %v203 = vsel %vm186, %v149, 0.0
        %v204 = vadd.f32 %v202, %v203
        %v205 = vsel %vm186, %v157, 0.0
        %v206 = vadd.f32 %v204, %v205
        %v207 = vsel %vm186, %v162, 0.0
        %v208 = vsel %vm186, %v170, 0.0
        %v209 = vadd.f32 %v207, %v208
        %v210 = vsel %vm186, %v178, 0.0
        %v211 = vadd.f32 %v209, %v210
        %v212 = vsel %vm186, %v163, 0.0
        %v213 = vsel %vm186, %v171, 0.0
        %v214 = vadd.f32 %v212, %v213
        %v215 = vsel %vm186, %v179, 0.0
        %v216 = vadd.f32 %v214, %v215
        %v217 = vsel %vm186, %v164, 0.0
        %v218 = vsel %vm186, %v172, 0.0
        %v219 = vadd.f32 %v217, %v218
        %v220 = vsel %vm186, %v180, 0.0
        %v221 = vadd.f32 %v219, %v220
        %v222 = vsel %vm186, %v165, 0.0
        %v223 = vsel %vm186, %v173, 0.0
        %v224 = vadd.f32 %v222, %v223
        %v225 = vsel %vm186, %v181, 0.0
        %v226 = vadd.f32 %v224, %v225
        %v227 = vrcp.pop 3.0
        %v228 = vmul.f32 %v191, %v227
        %v229 = vmul.f32 %v196, %v227
        %v230 = vmul.f32 %v201, %v227
        %v231 = vmul.f32 %v206, %v227
        %v232 = vmul.f32 %v211, %v227
        %v233 = vmul.f32 %v216, %v227
        %v234 = vmul.f32 %v221, %v227
        %v235 = vmul.f32 %v226, %v227
        %v236 = vsub.f32 %v142, %v138
        %v237 = vsub.f32 %v143, %v139
        %v238 = vsub.f32 %v144, %v140
        %v239 = vsub.f32 %v145, %v141
        %v240 = vsub.f32 %v150, %v146
        %v241 = vsub.f32 %v151, %v147
        %v242 = vsub.f32 %v152, %v148
        %v243 = vsub.f32 %v153, %v149
        %v244 = vsub.f32 %v158, %v154
        %v245 = vsub.f32 %v159, %v155
        %v246 = vsub.f32 %v160, %v156
        %v247 = vsub.f32 %v161, %v157
        %v248 = vsub.f32 %v166, %v162
        %v249 = vsub.f32 %v167, %v163
        %v250 = vsub.f32 %v168, %v164
        %v251 = vsub.f32 %v169, %v165
        %v252 = vsub.f32 %v174, %v170
        %v253 = vsub.f32 %v175, %v171
        %v254 = vsub.f32 %v176, %v172
        %v255 = vsub.f32 %v177, %v173
        %v256 = vsub.f32 %v182, %v178
        %v257 = vsub.f32 %v183, %v179
        %v258 = vsub.f32 %v184, %v180
        %v259 = vsub.f32 %v185, %v181
        %v260 = vsel %vm186, %v236, 0.0
        %v261 = vsel %vm186, %v240, 0.0
        %v262 = vadd.f32 %v260, %v261
        %v263 = vsel %vm186, %v244, 0.0
        %v264 = vadd.f32 %v262, %v263
        %v265 = vsel %vm186, %v237, 0.0
        %v266 = vsel %vm186, %v241, 0.0
        %v267 = vadd.f32 %v265, %v266
        %v268 = vsel %vm186, %v245, 0.0
        %v269 = vadd.f32 %v267, %v268
        %v270 = vsel %vm186, %v238, 0.0
        %v271 = vsel %vm186, %v242, 0.0
        %v272 = vadd.f32 %v270, %v271
        %v273 = vsel %vm186, %v246, 0.0
        %v274 = vadd.f32 %v272, %v273
        %v275 = vsel %vm186, %v239, 0.0
        %v276 = vsel %vm186, %v243, 0.0
        %v277 = vadd.f32 %v275, %v276
        %v278 = vsel %vm186, %v247, 0.0
        %v279 = vadd.f32 %v277, %v278
        %v280 = vsel %vm186, %v248, 0.0
        %v281 = vsel %vm186, %v252, 0.0
        %v282 = vadd.f32 %v280, %v281
        %v283 = vsel %vm186, %v256, 0.0
        %v284 = vadd.f32 %v282, %v283
        %v285 = vsel %vm186, %v249, 0.0
        %v286 = vsel %vm186, %v253, 0.0
        %v287 = vadd.f32 %v285, %v286
        %v288 = vsel %vm186, %v257, 0.0
        %v289 = vadd.f32 %v287, %v288
        %v290 = vsel %vm186, %v250, 0.0
        %v291 = vsel %vm186, %v254, 0.0
        %v292 = vadd.f32 %v290, %v291
        %v293 = vsel %vm186, %v258, 0.0
        %v294 = vadd.f32 %v292, %v293
        %v295 = vsel %vm186, %v251, 0.0
        %v296 = vsel %vm186, %v255, 0.0
        %v297 = vadd.f32 %v295, %v296
        %v298 = vsel %vm186, %v259, 0.0
        %v299 = vadd.f32 %v297, %v298
        %v300 = vmul.f32 %v264, %v227
        %v301 = vmul.f32 %v269, %v227
        %v302 = vmul.f32 %v274, %v227
        %v303 = vmul.f32 %v279, %v227
        %v304 = vmul.f32 %v284, %v227
        %v305 = vmul.f32 %v289, %v227
        %v306 = vmul.f32 %v294, %v227
        %v307 = vmul.f32 %v299, %v227
        %v308 = vlaneseq
        %v309 = vshrl.u32 %v308, 7
        %v310 = vadd.s32 %v309, 8
        %v311 = vadd.s32 %v309, 16
        %v312 = vadd.s32 %v309, 24
        %v313 = vlaneseq
        %v314 = vand.u32 %v313, 127
        %v315 = vsub.s32 %v309, 1
        %v316 = vsub.s32 %v310, 1
        %v317 = vsub.s32 %v311, 1
        %v318 = vsub.s32 %v312, 1
        %vm319 = vcmp.eq.s32.totalorder %v314, %v315
        %vm320 = vcmp.eq.s32.totalorder %v314, %v316
        %vm321 = vcmp.eq.s32.totalorder %v314, %v317
        %vm322 = vcmp.eq.s32.totalorder %v314, %v318
        %vm323 = vcmp.eq.s32.totalorder %v309, 0
        %vm324 = vcmp.eq.s32.totalorder %v310, 0
        %vm325 = vcmp.eq.s32.totalorder %v311, 0
        %vm326 = vcmp.eq.s32.totalorder %v312, 0
        %vm327 = vcmp.eq.s32.totalorder %v314, 31
        %vm328 = vmand %vm323, %vm327
        %vm329 = vmand %vm324, %vm327
        %vm330 = vmand %vm325, %vm327
        %vm331 = vmand %vm326, %vm327
        %vm332 = vmor %vm319, %vm328
        %vm333 = vmor %vm320, %vm329
        %vm334 = vmor %vm321, %vm330
        %vm335 = vmor %vm322, %vm331
        %v336 = vadd.s32 %v309, 1
        %v337 = vadd.s32 %v310, 1
        %v338 = vadd.s32 %v311, 1
        %v339 = vadd.s32 %v312, 1
        %vm340 = vcmp.eq.s32.totalorder %v314, %v336
        %vm341 = vcmp.eq.s32.totalorder %v314, %v337
        %vm342 = vcmp.eq.s32.totalorder %v314, %v338
        %vm343 = vcmp.eq.s32.totalorder %v314, %v339
        %vm344 = vcmp.eq.s32.totalorder %v309, 31
        %vm345 = vcmp.eq.s32.totalorder %v310, 31
        %vm346 = vcmp.eq.s32.totalorder %v311, 31
        %vm347 = vcmp.eq.s32.totalorder %v312, 31
        %vm348 = vcmp.eq.s32.totalorder %v314, 0
        %vm349 = vmand %vm344, %vm348
        %vm350 = vmand %vm345, %vm348
        %vm351 = vmand %vm346, %vm348
        %vm352 = vmand %vm347, %vm348
        %vm353 = vmor %vm340, %vm349
        %vm354 = vmor %vm341, %vm350
        %vm355 = vmor %vm342, %vm351
        %vm356 = vmor %vm343, %vm352
        %v357 = vsel %vm332, 1, 0
        %v358 = vsel %vm333, 1, 0
        %v359 = vsel %vm334, 1, 0
        %v360 = vsel %vm335, 1, 0
        %v361 = vcvt.s32.f32 %v357
        %v362 = vcvt.s32.f32 %v358
        %v363 = vcvt.s32.f32 %v359
        %v364 = vcvt.s32.f32 %v360
        %v365 = vsel %vm353, 1, 0
        %v366 = vsel %vm354, 1, 0
        %v367 = vsel %vm355, 1, 0
        %v368 = vsel %vm356, 1, 0
        %v369 = vcvt.s32.f32 %v365
        %v370 = vcvt.s32.f32 %v366
        %v371 = vcvt.s32.f32 %v367
        %v372 = vcvt.s32.f32 %v368
        %v373 = vsub.f32 %v361, %v369
        %v374 = vsub.f32 %v362, %v370
        %v375 = vsub.f32 %v363, %v371
        %v376 = vsub.f32 %v364, %v372
        %v377 = vmul.f32 %v373, 0.5
        %v378 = vmul.f32 %v374, 0.5
        %v379 = vmul.f32 %v375, 0.5
        %v380 = vmul.f32 %v376, 0.5
        %v381 = vsub.f32 %v369, %v361
        %v382 = vsub.f32 %v370, %v362
        %v383 = vsub.f32 %v371, %v363
        %v384 = vsub.f32 %v372, %v364
        %v385 = vmul.f32 %v381, 0.5
        %v386 = vmul.f32 %v382, 0.5
        %v387 = vmul.f32 %v383, 0.5
        %v388 = vmul.f32 %v384, 0.5
        %v390 = vsel %vm186, %v228, 0
        %v393 = vsel %vm186, %v229, 0
        %v396 = vsel %vm186, %v230, 0
        %v399 = vsel %vm186, %v231, 0
        %v402 = vsel %vm186, %v232, 0
        %v405 = vsel %vm186, %v233, 0
        %v408 = vsel %vm186, %v234, 0
        %v411 = vsel %vm186, %v235, 0
        %413 = vmatprep.subr.mxu0 0.0
        %414 = vmatpush1.msra.mxu0 %v377
        %415 = vmatprep.subr.mxu0 0.0
        %416 = vmatpush1.msra.mxu0 %v378
        %417 = vmatprep.subr.mxu0 0.0
        %418 = vmatpush1.msra.mxu0 %v379
        %419 = vmatprep.subr.mxu0 0.0
        %420 = vmatpush1.msra.mxu0 %v380
        %421 = vmatprep.subr.mxu0 0.0
        %422 = vmatpush1.msra.mxu0 0.0
        %423 = vmatprep.subr.mxu0 0.0
        %424 = vmatpush1.msra.mxu0 0.0
        %425 = vmatprep.subr.mxu0 0.0
        %426 = vmatpush1.msra.mxu0 0.0
        %427 = vmatprep.subr.mxu0 0.0
        %428 = vmatpush1.msra.mxu0 0.0
        %429 = vmatprep.subr.mxu0 0.0
        %430 = vmatpush1.msra.mxu0 0.0
        %431 = vmatprep.subr.mxu0 0.0
        %432 = vmatpush1.msra.mxu0 0.0
        %433 = vmatprep.subr.mxu0 0.0
        %434 = vmatpush1.msra.mxu0 0.0
        %435 = vmatprep.subr.mxu0 0.0
        %436 = vmatpush1.msra.mxu0 0.0
        %437 = vmatprep.subr.mxu0 0.0
        %438 = vmatpush1.msra.mxu0 0.0
        %439 = vmatprep.subr.mxu0 0.0
        %440 = vmatpush1.msra.mxu0 0.0
        %441 = vmatprep.subr.mxu0 0.0
        %442 = vmatpush1.msra.mxu0 0.0
        %443 = vmatprep.subr.mxu0 0.0
        %444 = vmatpush1.msra.mxu0 0.0
        %445 = vmatprep.subr.mxu0 0.0
        %446 = vmatpush1.msra.mxu0 0.0
        %447 = vmatprep.subr.mxu0 0.0
        %448 = vmatpush1.msra.mxu0 0.0
        %449 = vmatprep.subr.mxu0 0.0
        %450 = vmatpush1.msra.mxu0 0.0
        %451 = vmatprep.subr.mxu0 0.0
        %452 = vmatpush1.msra.mxu0 0.0
        %453 = vmatprep.subr.mxu0 0.0
        %454 = vmatpush1.msra.mxu0 0.0
        %455 = vmatprep.subr.mxu0 0.0
        %456 = vmatpush1.msra.mxu0 0.0
        %457 = vmatprep.subr.mxu0 0.0
        %458 = vmatpush1.msra.mxu0 0.0
        %459 = vmatprep.subr.mxu0 0.0
        %460 = vmatpush1.msra.mxu0 0.0
        %461 = vmatprep.subr.mxu0 0.0
        %462 = vmatpush1.msra.mxu0 0.0
        %463 = vmatprep.subr.mxu0 0.0
        %464 = vmatpush1.msra.mxu0 0.0
        %465 = vmatprep.subr.mxu0 0.0
        %466 = vmatpush1.msra.mxu0 0.0
        %467 = vmatprep.subr.mxu0 0.0
        %468 = vmatpush1.msra.mxu0 0.0
        %469 = vmatprep.subr.mxu0 0.0
        %470 = vmatpush1.msra.mxu0 0.0
        %471 = vmatprep.subr.mxu0 0.0
        %472 = vmatpush1.msra.mxu0 0.0
        %473 = vmatprep.subr.mxu0 0.0
        %474 = vmatpush1.msra.mxu0 0.0
        %475 = vmatprep.subr.mxu0 0.0
        %476 = vmatpush1.msra.mxu0 0.0
        %477 = vmatprep.mubr.f32.mxu0 0.0
        %478 = vmatmul.mubr.f32.gmra.mrb[0].mxu0 %v390
        %v479 = vpop.f32.mrb[0].mxu0
        %v480 = vadd.f32 0.0, %v479
        %v481 = vpop.f32.mrb[0].mxu0
        %482 = vmatprep.mubr.f32.mxu0 0.0
        %483 = vmatmul.mubr.f32.gmra.mrb[0].mxu0 %v393
        %v484 = vpop.f32.mrb[0].mxu0
        %v485 = vadd.f32 0.0, %v484
        %v486 = vpop.f32.mrb[0].mxu0
        %487 = vmatprep.mubr.f32.mxu0 0.0
        %488 = vmatmul.mubr.f32.gmra.mrb[0].mxu0 %v396
        %v489 = vpop.f32.mrb[0].mxu0
        %v490 = vadd.f32 0.0, %v489
        %v491 = vpop.f32.mrb[0].mxu0
        %492 = vmatprep.mubr.f32.mxu0 0.0
        %493 = vmatmul.mubr.f32.gmra.mrb[0].mxu0 %v399
        %v494 = vpop.f32.mrb[0].mxu0
        %v495 = vadd.f32 0.0, %v494
        %v496 = vpop.f32.mrb[0].mxu0
        %497 = vmatprep.mubr.f32.mxu0 0.0
        %498 = vmatmul.mubr.f32.gmra.mrb[0].mxu0 %v402
        %v499 = vpop.f32.mrb[0].mxu0
        %v500 = vadd.f32 0.0, %v499
        %v501 = vpop.f32.mrb[0].mxu0
        %502 = vmatprep.mubr.f32.mxu0 0.0
        %503 = vmatmul.mubr.f32.gmra.mrb[0].mxu0 %v405
        %v504 = vpop.f32.mrb[0].mxu0
        %v505 = vadd.f32 0.0, %v504
        %v506 = vpop.f32.mrb[0].mxu0
        %507 = vmatprep.mubr.f32.mxu0 0.0
        %508 = vmatmul.mubr.f32.gmra.mrb[0].mxu0 %v408
        %v509 = vpop.f32.mrb[0].mxu0
        %v510 = vadd.f32 0.0, %v509
        %v511 = vpop.f32.mrb[0].mxu0
        %512 = vmatprep.mubr.f32.mxu0 0.0
        %513 = vmatmul.mubr.f32.gmra.mrb[0].mxu0 %v411
        %v514 = vpop.f32.mrb[0].mxu0
        %v515 = vadd.f32 0.0, %v514
        %v516 = vpop.f32.mrb[0].mxu0
        %517 = vdwg.mxu0
        %v518 = vsub.f32 0.0, %v480
        %v519 = vsub.f32 0.0, %v485
        %v520 = vsub.f32 0.0, %v490
        %v521 = vsub.f32 0.0, %v495
        %v522 = vsub.f32 0.0, %v500
        %v523 = vsub.f32 0.0, %v505
        %v524 = vsub.f32 0.0, %v510
        %v525 = vsub.f32 0.0, %v515
        %v526 = vmul.f32 %v518, %v300
        %v527 = vmul.f32 %v519, %v301
        %v528 = vmul.f32 %v520, %v302
        %v529 = vmul.f32 %v521, %v303
        %v530 = vmul.f32 %v522, %v304
        %v531 = vmul.f32 %v523, %v305
        %v532 = vmul.f32 %v524, %v306
        %v533 = vmul.f32 %v525, %v307
        %534 = vst.msk [vmem:[%s135] sm:$0xff] %vm186, %v526
        %535 = vst.msk [vmem:[%s135 + $0x8] sm:$0xff] %vm186, %v527
        %536 = vst.msk [vmem:[%s135 + $0x10] sm:$0xff] %vm186, %v528
        %537 = vst.msk [vmem:[%s135 + $0x18] sm:$0xff] %vm186, %v529
        %538 = vst.msk [vmem:[%s135 + $0x40] sm:$0xff] %vm186, %v530
        %539 = vst.msk [vmem:[%s135 + $0x48] sm:$0xff] %vm186, %v531
        %540 = vst.msk [vmem:[%s135 + $0x50] sm:$0xff] %vm186, %v532
        %541 = vst.msk [vmem:[%s135 + $0x58] sm:$0xff] %vm186, %v533
        %v543 = vsel %vm186, %v385, 0
        %v546 = vsel %vm186, %v386, 0
        %v549 = vsel %vm186, %v387, 0
        %v552 = vsel %vm186, %v388, 0
        %554 = vmatprep.subr.mxu0 0.0
        %555 = vmatpush1.msra.mxu0 %v228
        %556 = vmatprep.subr.mxu0 0.0
        %557 = vmatpush1.msra.mxu0 %v229
        %558 = vmatprep.subr.mxu0 0.0
        %559 = vmatpush1.msra.mxu0 %v230
        %560 = vmatprep.subr.mxu0 0.0
        %561 = vmatpush1.msra.mxu0 %v231
        %562 = vmatprep.subr.mxu0 0.0
        %563 = vmatpush1.msra.mxu0 0.0
        %564 = vmatprep.subr.mxu0 0.0
        %565 = vmatpush1.msra.mxu0 0.0
        %566 = vmatprep.subr.mxu0 0.0
        %567 = vmatpush1.msra.mxu0 0.0
        %568 = vmatprep.subr.mxu0 0.0
        %569 = vmatpush1.msra.mxu0 0.0
        %570 = vmatprep.subr.mxu0 0.0
        %571 = vmatpush1.msra.mxu0 0.0
        %572 = vmatprep.subr.mxu0 0.0
        %573 = vmatpush1.msra.mxu0 0.0
        %574 = vmatprep.subr.mxu0 0.0
        %575 = vmatpush1.msra.mxu0 0.0
        %576 = vmatprep.subr.mxu0 0.0
        %577 = vmatpush1.msra.mxu0 0.0
        %578 = vmatprep.subr.mxu0 0.0
        %579 = vmatpush1.msra.mxu0 0.0
        %580 = vmatprep.subr.mxu0 0.0
        %581 = vmatpush1.msra.mxu0 0.0
        %582 = vmatprep.subr.mxu0 0.0
        %583 = vmatpush1.msra.mxu0 0.0
        %584 = vmatprep.subr.mxu0 0.0
        %585 = vmatpush1.msra.mxu0 0.0
        %586 = vmatprep.subr.mxu0 0.0
        %587 = vmatpush1.msra.mxu0 0.0
        %588 = vmatprep.subr.mxu0 0.0
        %589 = vmatpush1.msra.mxu0 0.0
        %590 = vmatprep.subr.mxu0 0.0
        %591 = vmatpush1.msra.mxu0 0.0
        %592 = vmatprep.subr.mxu0 0.0
        %593 = vmatpush1.msra.mxu0 0.0
        %594 = vmatprep.subr.mxu0 0.0
        %595 = vmatpush1.msra.mxu0 0.0
        %596 = vmatprep.subr.mxu0 0.0
        %597 = vmatpush1.msra.mxu0 0.0
        %598 = vmatprep.subr.mxu0 0.0
        %599 = vmatpush1.msra.mxu0 0.0
        %600 = vmatprep.subr.mxu0 0.0
        %601 = vmatpush1.msra.mxu0 0.0
        %602 = vmatprep.subr.mxu0 0.0
        %603 = vmatpush1.msra.mxu0 0.0
        %604 = vmatprep.subr.mxu0 0.0
        %605 = vmatpush1.msra.mxu0 0.0
        %606 = vmatprep.subr.mxu0 0.0
        %607 = vmatpush1.msra.mxu0 0.0
        %608 = vmatprep.subr.mxu0 0.0
        %609 = vmatpush1.msra.mxu0 0.0
        %610 = vmatprep.subr.mxu0 0.0
        %611 = vmatpush1.msra.mxu0 0.0
        %612 = vmatprep.subr.mxu0 0.0
        %613 = vmatpush1.msra.mxu0 0.0
        %614 = vmatprep.subr.mxu0 0.0
        %615 = vmatpush1.msra.mxu0 0.0
        %616 = vmatprep.subr.mxu0 0.0
        %617 = vmatpush1.msra.mxu0 0.0
        %618 = vmatprep.mubr.f32.mxu0 0.0
        %619 = vmatmul.mubr.f32.gmra.mrb[0].mxu0 %v543
        %v620 = vpop.f32.mrb[0].mxu0
        %v621 = vadd.f32 0.0, %v620
        %v622 = vpop.f32.mrb[0].mxu0
        %623 = vmatprep.mubr.f32.mxu0 0.0
        %624 = vmatmul.mubr.f32.gmra.mrb[0].mxu0 %v546
        %v625 = vpop.f32.mrb[0].mxu0
        %v626 = vadd.f32 0.0, %v625
        %v627 = vpop.f32.mrb[0].mxu0
        %628 = vmatprep.mubr.f32.mxu0 0.0
        %629 = vmatmul.mubr.f32.gmra.mrb[0].mxu0 %v549
        %v630 = vpop.f32.mrb[0].mxu0
        %v631 = vadd.f32 0.0, %v630
        %v632 = vpop.f32.mrb[0].mxu0
        %633 = vmatprep.mubr.f32.mxu0 0.0
        %634 = vmatmul.mubr.f32.gmra.mrb[0].mxu0 %v552
        %v635 = vpop.f32.mrb[0].mxu0
        %v636 = vadd.f32 0.0, %v635
        %v637 = vpop.f32.mrb[0].mxu0
        %638 = vdwg.mxu0
        %v639 = vsub.f32 0.0, %v621
        %v640 = vsub.f32 0.0, %v626
        %v641 = vsub.f32 0.0, %v631
        %v642 = vsub.f32 0.0, %v636
        %v643 = vmul.f32 %v639, %v300
        %v644 = vmul.f32 %v640, %v301
        %v645 = vmul.f32 %v641, %v302
        %v646 = vmul.f32 %v642, %v303
        %s647 = scalar_lea.vmem %s135, 32 [#allocation5]
        %648 = vst.msk [vmem:[%s647] sm:$0xff] %vm186, %v643
        %649 = vst.msk [vmem:[%s647 + $0x8] sm:$0xff] %vm186, %v644
        %650 = vst.msk [vmem:[%s647 + $0x10] sm:$0xff] %vm186, %v645
        %651 = vst.msk [vmem:[%s647 + $0x18] sm:$0xff] %vm186, %v646
        %652 = vmatprep.subr.mxu0 0.0
        %653 = vmatpush1.msra.mxu0 %v232
        %654 = vmatprep.subr.mxu0 0.0
        %655 = vmatpush1.msra.mxu0 %v233
        %656 = vmatprep.subr.mxu0 0.0
        %657 = vmatpush1.msra.mxu0 %v234
        %658 = vmatprep.subr.mxu0 0.0
        %659 = vmatpush1.msra.mxu0 %v235
        %660 = vmatprep.subr.mxu0 0.0
        %661 = vmatpush1.msra.mxu0 0.0
        %662 = vmatprep.subr.mxu0 0.0
        %663 = vmatpush1.msra.mxu0 0.0
        %664 = vmatprep.subr.mxu0 0.0
        %665 = vmatpush1.msra.mxu0 0.0
        %666 = vmatprep.subr.mxu0 0.0
        %667 = vmatpush1.msra.mxu0 0.0
        %668 = vmatprep.subr.mxu0 0.0
        %669 = vmatpush1.msra.mxu0 0.0
        %670 = vmatprep.subr.mxu0 0.0
        %671 = vmatpush1.msra.mxu0 0.0
        %672 = vmatprep.subr.mxu0 0.0
        %673 = vmatpush1.msra.mxu0 0.0
        %674 = vmatprep.subr.mxu0 0.0
        %675 = vmatpush1.msra.mxu0 0.0
        %676 = vmatprep.subr.mxu0 0.0
        %677 = vmatpush1.msra.mxu0 0.0
        %678 = vmatprep.subr.mxu0 0.0
        %679 = vmatpush1.msra.mxu0 0.0
        %680 = vmatprep.subr.mxu0 0.0
        %681 = vmatpush1.msra.mxu0 0.0
        %682 = vmatprep.subr.mxu0 0.0
        %683 = vmatpush1.msra.mxu0 0.0
        %684 = vmatprep.subr.mxu0 0.0
        %685 = vmatpush1.msra.mxu0 0.0
        %686 = vmatprep.subr.mxu0 0.0
        %687 = vmatpush1.msra.mxu0 0.0
        %688 = vmatprep.subr.mxu0 0.0
        %689 = vmatpush1.msra.mxu0 0.0
        %690 = vmatprep.subr.mxu0 0.0
        %691 = vmatpush1.msra.mxu0 0.0
        %692 = vmatprep.subr.mxu0 0.0
        %693 = vmatpush1.msra.mxu0 0.0
        %694 = vmatprep.subr.mxu0 0.0
        %695 = vmatpush1.msra.mxu0 0.0
        %696 = vmatprep.subr.mxu0 0.0
        %697 = vmatpush1.msra.mxu0 0.0
        %698 = vmatprep.subr.mxu0 0.0
        %699 = vmatpush1.msra.mxu0 0.0
        %700 = vmatprep.subr.mxu0 0.0
        %701 = vmatpush1.msra.mxu0 0.0
        %702 = vmatprep.subr.mxu0 0.0
        %703 = vmatpush1.msra.mxu0 0.0
        %704 = vmatprep.subr.mxu0 0.0
        %705 = vmatpush1.msra.mxu0 0.0
        %706 = vmatprep.subr.mxu0 0.0
        %707 = vmatpush1.msra.mxu0 0.0
        %708 = vmatprep.subr.mxu0 0.0
        %709 = vmatpush1.msra.mxu0 0.0
        %710 = vmatprep.subr.mxu0 0.0
        %711 = vmatpush1.msra.mxu0 0.0
        %712 = vmatprep.subr.mxu0 0.0
        %713 = vmatpush1.msra.mxu0 0.0
        %714 = vmatprep.subr.mxu0 0.0
        %715 = vmatpush1.msra.mxu0 0.0
        %716 = vmatprep.mubr.f32.mxu0 0.0
        %717 = vmatmul.mubr.f32.gmra.mrb[0].mxu0 %v543
        %v718 = vpop.f32.mrb[0].mxu0
        %v719 = vadd.f32 0.0, %v718
        %v720 = vpop.f32.mrb[0].mxu0
        %721 = vmatprep.mubr.f32.mxu0 0.0
        %722 = vmatmul.mubr.f32.gmra.mrb[0].mxu0 %v546
        %v723 = vpop.f32.mrb[0].mxu0
        %v724 = vadd.f32 0.0, %v723
        %v725 = vpop.f32.mrb[0].mxu0
        %726 = vmatprep.mubr.f32.mxu0 0.0
        %727 = vmatmul.mubr.f32.gmra.mrb[0].mxu0 %v549
        %v728 = vpop.f32.mrb[0].mxu0
        %v729 = vadd.f32 0.0, %v728
        %v730 = vpop.f32.mrb[0].mxu0
        %731 = vmatprep.mubr.f32.mxu0 0.0
        %732 = vmatmul.mubr.f32.gmra.mrb[0].mxu0 %v552
        %v733 = vpop.f32.mrb[0].mxu0
        %v734 = vadd.f32 0.0, %v733
        %v735 = vpop.f32.mrb[0].mxu0
        %736 = vdwg.mxu0
        %v737 = vsub.f32 0.0, %v719
        %v738 = vsub.f32 0.0, %v724
        %v739 = vsub.f32 0.0, %v729
        %v740 = vsub.f32 0.0, %v734
        %v741 = vmul.f32 %v737, %v304
        %v742 = vmul.f32 %v738, %v305
        %v743 = vmul.f32 %v739, %v306
        %v744 = vmul.f32 %v740, %v307
        %s745 = scalar_lea.vmem %s135, 96 [#allocation5]
        %746 = vst.msk [vmem:[%s745] sm:$0xff] %vm186, %v741
        %747 = vst.msk [vmem:[%s745 + $0x8] sm:$0xff] %vm186, %v742
        %748 = vst.msk [vmem:[%s745 + $0x10] sm:$0xff] %vm186, %v743
        %749 = vst.msk [vmem:[%s745 + $0x18] sm:$0xff] %vm186, %v744
        %s750 = sand.u32 %s52, 1
        %s751 = scalar_lea.sflag [#allocation4], %s750
        %s752 = sand.u32 %s52, 1
        %s753 = smul.addr %s752, 128
        %s754 = scalar_lea.vmem [#allocation5], %s753
        // Predicated region
        $region29: #{tpu_custom_call.1} parent=23 // pred_check
          %p755 = pneg %p62
        $region30: #{tpu_custom_call.1} parent=23 // pred_check_branch
          %757 = sbr.rel (%p755) target = $region32
        $region31: #{tpu_custom_call.1} parent=23 // pred_region
          %s758 = smul.u32 2, %s18
          %s760 = ssub.s32 2048, 2048
          %761 = vsyncadd %s751, %s760
          %s762 = smul.addr %s758, 8
          %s763 = smul.addr %s762, 128
          %s764 = scalar_lea.hbm %s1, %s763
          %s765 = sshll.u32 %s754, 4
          %s766 = int_to_ptr.vmem [resolvable:$true] %s765
          %771 = dma.vmem_to_hbm [thread:$0]  %s766, 2048, %s764, %s751, 128, 128, 8
        $region32: #{tpu_custom_call.1} parent=23 // pred_fallthru
          _
      $region24: #{tpu_custom_call.1} parent=5 // pred_fallthru
        _
      %p772 = scmp.le.s32.totalorder 2, %s13
      // Predicated region
      $region33: #{tpu_custom_call.1} parent=5 // pred_check
        %p773 = pneg %p772
      $region34: #{tpu_custom_call.1} parent=5 // pred_check_branch
        %775 = sbr.rel (%p773) target = $region36
      $region35: #{tpu_custom_call.1} parent=5 // pred_region
        %s776 = ssub.s32 %s13, 2
        // Predicated region
        $region37: #{tpu_custom_call.1} parent=35 // pred_check
          %p777 = pneg %p68
        $region38: #{tpu_custom_call.1} parent=35 // pred_check_branch
          %779 = sbr.rel (%p777) target = $region40
        $region39: #{tpu_custom_call.1} parent=35 // pred_region
          %s780 = sand.u32 %s53, 1
          %s781 = scalar_lea.sflag [#allocation4], %s780
          %s782 = sand.u32 %s53, 1
          %s783 = smul.addr %s782, 128
          %s784 = scalar_lea.vmem [#allocation5], %s783
          %785 = dma.done %s781, 2048
        $region40: #{tpu_custom_call.1} parent=35 // pred_fallthru
          _
      $region36: #{tpu_custom_call.1} parent=5 // pred_fallthru
        _
    $region6: #{tpu_custom_call.1} parent=1 // loop_footer
      %s17 = sadd.s32 1, %s13
    $region7: #{tpu_custom_call.1} parent=1 // loop_footer_branch
      %12 = sbr.rel target = $region3
    $region8: #{tpu_custom_call.1} parent=1 // loop_exit
      _
    %786 = vsyncpa [#allocation3], 1
    %s787 = scalar_lea.sflag [#allocation3], 1
    %788 = vsyncpa %s787, 1
    %789 = vsyncpa [#allocation4], 1
    %s790 = scalar_lea.sflag [#allocation4], 1
    %791 = vsyncpa %s790, 1

</llo_original>
